<compile_context>
chip_gen: v6e
topology: v6e:2x2x1
jax: 0.10.0
libtpu: 0.0.40
codegen_flags: <defaults>
</compile_context>

<pallas_src>
import functools
import math

import jax
import jax.numpy as jnp
from jax.experimental import pallas as pl
from jax.experimental.pallas import tpu as pltpu


# ----------------------------------------------------------------------------
# Fused kernel: pool + both 1x1 convs (one matmul) + normalize/softmax epilogue
# ----------------------------------------------------------------------------
def _make_fused_kernel(n_ori_lanes):
    def kernel(x_ref, w_ref, b_ref, p_ref, out_ref):
        # x_ref: (TR, 2*W*C)  TR pooled rows, each = its two input rows (NHWC).
        # w_ref: (2*W*C, L)   block-diagonal fused weight (pool + ori||con conv).
        # b_ref: (1, L)       per-lane bias (channel-major lanes).
        # p_ref: (L, L)       pair-swap permutation: partner(lane) = lane ^ 1.
        x = x_ref[...]
        lin = jnp.dot(x, w_ref[...], preferred_element_type=jnp.float32)
        lin = lin + b_ref[...]

        # Partner value of each lane (its even/odd neighbour) via a tiny MXU
        # permutation matmul — avoids any in-kernel relayout/reshape.
        partner = jnp.dot(lin, p_ref[...], preferred_element_type=jnp.float32)

        lane = jax.lax.broadcasted_iota(jnp.int32, lin.shape, 1)
        is_ori = lane < n_ori_lanes

        # ori lanes: L2-normalize each (lin, partner) pair (F.normalize eps).
        nrm = jnp.sqrt(lin * lin + partner * partner)
        ori_out = lin / jnp.maximum(nrm, 1e-12)

        # conf lanes (bins == 2): softmax over the (lin, partner) pair.
        m = jnp.maximum(lin, partner)
        e = jnp.exp(lin - m)
        ep = jnp.exp(partner - m)
        conf_out = e / (e + ep)

        out_ref[...] = jnp.where(is_ori, ori_out, conf_out)

    return kernel


def _choose_tile_rows(n_rows, row_bytes, vmem_budget_bytes=6 * 1024 * 1024):
    """Pooled rows per grid step, sized from a VMEM budget (double-buffered input)."""
    tr = max(8, (vmem_budget_bytes // (2 * row_bytes)) // 8 * 8)
    tr = min(tr, 512)                                   # v7x-safe cap
    rows_up = ((n_rows + 7) // 8) * 8
    tr = min(tr, rows_up)
    # Keep >= 2 grid steps when possible so the "parallel" axis can still be
    # split across v7x's two TensorCores.
    if rows_up >= 16:
        tr = min(tr, max(8, (rows_up // 2) // 8 * 8))
    return tr


# ----------------------------------------------------------------------------
# Full forward (glue = layout plumbing only)
# ----------------------------------------------------------------------------
@functools.partial(jax.jit, static_argnames=("bins",))
def model_forward(x_nchw, params, bins):
    N, C, H, W = x_nchw.shape
    Hp, Wp = H // 2, W // 2
    assert bins == 2, "fused epilogue implemented for the module default bins=2"
    assert Wp % 2 == 0, "pooled width must be even so the .view() pairs do not wrap"

    OC = 3 * bins                # 2*bins ori channels + bins conf channels
    L = OC * Wp                  # output lanes per pooled row (channel-major)
    K = 2 * (2 * Wp) * C         # both input rows of one pooled row, channels-last

    # --- one NCHW->NHWC transpose (the only extra HBM pass), then pure reshapes
    x = x_nchw[:, :, :2 * Hp, :2 * Wp]                  # AvgPool2d floor behaviour
    xr = jnp.transpose(x, (0, 2, 3, 1)).reshape(N * Hp, K)

    # --- fused weight: AvgPool(2x2) + [ori_conv || con_conv] as ONE matmul.
    # Row index  k  = h2*(2*Wp*C) + (2*wp + w2)*C + c ;  column = o*Wp + wp.
    w_cat = jnp.concatenate([params["ori_w"], params["con_w"]], axis=1)   # (C, OC)
    b_cat = jnp.concatenate([params["ori_b"], params["con_b"]], axis=0)   # (OC,)
    eye_wp = jnp.eye(Wp, dtype=jnp.float32)
    w_blk = 0.25 * jnp.einsum("co,iw->icow", w_cat, eye_wp)   # (Wp_in, C, OC, Wp_out)
    w_big = jnp.broadcast_to(w_blk[None, :, None], (2, Wp, 2, C, OC, Wp))
    w_big = w_big.reshape(K, L)
    b_lanes = jnp.repeat(b_cat, Wp).reshape(1, L)

    # pair-swap permutation: partner(lane) = lane ^ 1
    idx = jnp.arange(L)
    pair_perm = ((idx[:, None] ^ 1) == idx[None, :]).astype(jnp.float32)

    # --- tiling over pooled rows (pad the tail so no rows are dropped)
    NR = N * Hp
    TR = _choose_tile_rows(NR, K * 4)
    NRp = ((NR + TR - 1) // TR) * TR
    if NRp != NR:
        xr = jnp.pad(xr, ((0, NRp - NR), (0, 0)))

    y = pl.pallas_call(
        _make_fused_kernel(2 * bins * Wp),
        out_shape=jax.ShapeDtypeStruct((NRp, L), jnp.float32),
        grid_spec=pltpu.PrefetchScalarGridSpec(
            num_scalar_prefetch=0,
            grid=(NRp // TR,),
            in_specs=[
                pl.BlockSpec((TR, K), lambda i: (i, 0)),
                pl.BlockSpec((K, L), lambda i: (0, 0)),
                pl.BlockSpec((1, L), lambda i: (0, 0)),
                pl.BlockSpec((L, L), lambda i: (0, 0)),
            ],
            out_specs=pl.BlockSpec((TR, L), lambda i: (i, 0)),
        ),
        compiler_params=pltpu.CompilerParams(
            dimension_semantics=("parallel",)),
    )(xr, w_big, b_lanes, pair_perm)

    # --- tiny output-side reorder back to PyTorch's NCHW .view() element order
    y = y[:NR].reshape(N, Hp, OC, Wp)
    ori = jnp.transpose(y[:, :, :2 * bins, :], (0, 2, 1, 3)).reshape(-1, bins, 2)
    conf = jnp.transpose(y[:, :, 2 * bins:, :], (0, 2, 1, 3)).reshape(-1, bins)
    return ori, conf


# ----------------------------------------------------------------------------
# Pure-JAX reference (mirrors the PyTorch module) for correctness check
# ----------------------------------------------------------------------------
def reference_forward(x, params, bins):
    N, C, H, W = x.shape
    Hp, Wp = H // 2, W // 2
    p = x.reshape(N, C, Hp, 2, Wp, 2).mean(axis=(3, 5))          # AvgPool2d(2)
    ori = jnp.einsum("nchw,co->nohw", p, params["ori_w"]) + \
        params["ori_b"].reshape(1, -1, 1, 1)
    con = jnp.einsum("nchw,co->nohw", p, params["con_w"]) + \
        params["con_b"].reshape(1, -1, 1, 1)
    ori = ori.reshape(-1, bins, 2)
    ori = ori / jnp.maximum(
        jnp.sqrt(jnp.sum(ori * ori, axis=2, keepdims=True)), 1e-12)
    con = con.reshape(-1, bins)
    con = jax.nn.softmax(con, axis=1)
    return ori, con


if __name__ == "__main__":
    # Small shapes: batch=2, in_channels=128, spatial=8x8, bins=2
    N, C_in, H, W = 2, 128, 8, 8
    bins = 2

    key = jax.random.PRNGKey(0)
    kx, k1, k2, k3, k4 = jax.random.split(key, 5)
    x = jax.random.normal(kx, (N, C_in, H, W), dtype=jnp.float32)

    # Deterministic Conv2d-style init (kaiming-uniform bound = 1/sqrt(fan_in))
    bound = 1.0 / math.sqrt(C_in)
    params = {
        # stored as (C_in, O) so the 1x1 convs are plain matmuls in the kernel
        "ori_w": jax.random.uniform(k1, (C_in, 2 * bins), jnp.float32,
                                    -bound, bound),
        "ori_b": jax.random.uniform(k2, (2 * bins,), jnp.float32,
                                    -bound, bound),
        "con_w": jax.random.uniform(k3, (C_in, bins), jnp.float32,
                                    -bound, bound),
        "con_b": jax.random.uniform(k4, (bins,), jnp.float32,
                                    -bound, bound),
    }

    ori, conf = model_forward(x, params, bins=bins)
    jax.block_until_ready((ori, conf))

    ori_ref, conf_ref = reference_forward(x, params, bins)
    assert ori.shape == (N * (H // 2) * (W // 2), bins, 2)
    assert conf.shape == (N * (H // 2) * (W // 2), bins)
    assert jnp.allclose(ori, ori_ref, atol=1e-3), "ori mismatch"
    assert jnp.allclose(conf, conf_ref, atol=1e-3), "conf mismatch"

    print("KERNEL_OK")
</pallas_src>

<mosaic_0001>
module attributes {stable_mosaic.version = 11 : i64} {
  func.func @kernel(%arg0: i32, %arg1: memref<8x2048xf32, #tpu.memory_space<vmem>>, %arg2: memref<2048x24xf32, #tpu.memory_space<vmem>>, %arg3: memref<1x24xf32, #tpu.memory_space<vmem>>, %arg4: memref<24x24xf32, #tpu.memory_space<vmem>>, %arg5: memref<8x24xf32, #tpu.memory_space<vmem>>) attributes {dimension_semantics = [#tpu.dimension_semantics<parallel>], iteration_bounds = array<i64: 1>, scalar_prefetch = 0 : i64, scratch_operands = 0 : i64, tpu.core_type = #tpu.core_type<tc>, window_params = [{transform_indices = @transform_0, window_bounds = array<i64: 8, 2048>}, {pipeline_mode = #tpu.pipeline_mode<synchronous>, transform_indices = @transform_1, window_bounds = array<i64: 2048, 24>}, {pipeline_mode = #tpu.pipeline_mode<synchronous>, transform_indices = @transform_2, window_bounds = array<i64: 1, 24>}, {pipeline_mode = #tpu.pipeline_mode<synchronous>, transform_indices = @transform_3, window_bounds = array<i64: 24, 24>}, {transform_indices = @transform_4, window_bounds = array<i64: 8, 24>}]} {
    %c0 = arith.constant 0 : index
    %c0_0 = arith.constant 0 : index
    %0 = vector.load %arg1[%c0, %c0_0] : memref<8x2048xf32, #tpu.memory_space<vmem>>, vector<8x2048xf32>
    %c0_1 = arith.constant 0 : index
    %c0_2 = arith.constant 0 : index
    %1 = vector.load %arg2[%c0_1, %c0_2] : memref<2048x24xf32, #tpu.memory_space<vmem>>, vector<2048x24xf32>
    %cst = arith.constant dense<0.000000e+00> : vector<8x24xf32>
    %2 = tpu.matmul %0, %1, %cst {dimension_numbers = #tpu.dot_dimension_numbers<[1], [0], [0], [1], [0, 0, 1, 1], [], []>} : vector<8x2048xf32>, vector<2048x24xf32>, vector<8x24xf32> -> vector<8x24xf32>
    %c0_3 = arith.constant 0 : index
    %c0_4 = arith.constant 0 : index
    %3 = vector.load %arg3[%c0_3, %c0_4] : memref<1x24xf32, #tpu.memory_space<vmem>>, vector<1x24xf32>
    %4 = vector.broadcast %3 : vector<1x24xf32> to vector<8x24xf32>
    %5 = arith.addf %2, %4 : vector<8x24xf32>
    %c0_5 = arith.constant 0 : index
    %c0_6 = arith.constant 0 : index
    %6 = vector.load %arg4[%c0_5, %c0_6] : memref<24x24xf32, #tpu.memory_space<vmem>>, vector<24x24xf32>
    %cst_7 = arith.constant dense<0.000000e+00> : vector<8x24xf32>
    %7 = tpu.matmul %5, %6, %cst_7 {dimension_numbers = #tpu.dot_dimension_numbers<[1], [0], [0], [1], [0, 0, 1, 1], [], []>} : vector<8x24xf32>, vector<24x24xf32>, vector<8x24xf32> -> vector<8x24xf32>
    %8 = tpu.iota {dimensions = array<i32: 1>} : vector<8x24xi32>
    %c16_i32 = arith.constant 16 : i32
    %9 = vector.broadcast %c16_i32 : i32 to vector<8x24xi32>
    %10 = arith.cmpi slt, %8, %9 : vector<8x24xi32>
    %11 = arith.mulf %5, %5 : vector<8x24xf32>
    %12 = arith.mulf %7, %7 : vector<8x24xf32>
    %13 = arith.addf %11, %12 : vector<8x24xf32>
    %14 = math.sqrt %13 : vector<8x24xf32>
    %cst_8 = arith.constant 9.99999996E-13 : f32
    %15 = vector.broadcast %cst_8 : f32 to vector<8x24xf32>
    %16 = arith.maximumf %14, %15 : vector<8x24xf32>
    %17 = arith.divf %5, %16 : vector<8x24xf32>
    %18 = arith.maximumf %5, %7 : vector<8x24xf32>
    %19 = arith.subf %5, %18 : vector<8x24xf32>
    %20 = math.exp %19 : vector<8x24xf32>
    %21 = arith.subf %7, %18 : vector<8x24xf32>
    %22 = math.exp %21 : vector<8x24xf32>
    %23 = arith.addf %20, %22 : vector<8x24xf32>
    %24 = arith.divf %20, %23 : vector<8x24xf32>
    %25 = arith.select %10, %17, %24 : vector<8x24xi1>, vector<8x24xf32>
    %c0_9 = arith.constant 0 : index
    %c0_10 = arith.constant 0 : index
    %26 = vector.load %arg5[%c0_9, %c0_10] : memref<8x24xf32, #tpu.memory_space<vmem>>, vector<8x24xf32>
    tpu.vector_store %arg5[%c0_9, %c0_10], %25 {strides = array<i32>} : memref<8x24xf32, #tpu.memory_space<vmem>>, vector<8x24xf32>,
    return
  }
  func.func @transform_0(%arg0: i32) -> (i32, i32) {
    %c0_i32 = arith.constant 0 : i32
    %c0_i32_0 = arith.constant 0 : i32
    return %arg0, %c0_i32 : i32, i32
  }
  func.func @transform_1(%arg0: i32) -> (i32, i32) {
    %c0_i32 = arith.constant 0 : i32
    %c0_i32_0 = arith.constant 0 : i32
    %c0_i32_1 = arith.constant 0 : i32
    return %c0_i32, %c0_i32_0 : i32, i32
  }
  func.func @transform_2(%arg0: i32) -> (i32, i32) {
    %c0_i32 = arith.constant 0 : i32
    %c0_i32_0 = arith.constant 0 : i32
    %c0_i32_1 = arith.constant 0 : i32
    return %c0_i32, %c0_i32_0 : i32, i32
  }
  func.func @transform_3(%arg0: i32) -> (i32, i32) {
    %c0_i32 = arith.constant 0 : i32
    %c0_i32_0 = arith.constant 0 : i32
    %c0_i32_1 = arith.constant 0 : i32
    return %c0_i32, %c0_i32_0 : i32, i32
  }
  func.func @transform_4(%arg0: i32) -> (i32, i32) {
    %c0_i32 = arith.constant 0 : i32
    %c0_i32_0 = arith.constant 0 : i32
    return %arg0, %c0_i32 : i32, i32
  }
}

</mosaic_0001>

<llo_original>
// kernel: model_forward.1
$region0: #{model_forward.1}
  #allocation0 [shape = 'u32[]', space=smem, size = 0x4, offset = 0x4, fixed_abs, tag = 'smem constant byte address 0x4 - core index']
  #allocation1 [shape = 'u32[144,128]{1,0:T(1,128)}', space=vmem, size = 0x12000, scoped, tag = 'internal scratch']
  %s0 = inlined_call_operand.vmem [shape: f32[8,2048], index: 0, kind: input, shape index: {}]
  %s1 = inlined_call_operand.vmem [shape: f32[2048,24], index: 1, kind: input, shape index: {}]
  %s2 = inlined_call_operand.vmem [shape: f32[1,24], index: 2, kind: input, shape index: {}]
  %s3 = inlined_call_operand.vmem [shape: f32[24,24], index: 3, kind: input, shape index: {}]
  %s4 = inlined_call_operand.vmem [shape: f32[8,24], index: 4, kind: output, shape index: {}]
  %s5 = sld [smem:[#allocation0]]
  $region26: #{model_forward.1} parent=0
    _
  %s7 = ssub.s32 1, %s5
  %s8 = scalar_select 0, %s7, %s5
  // Predicated region
  $region2: #{model_forward.1} parent=0 // pred_check
    _
  $region3: #{model_forward.1} parent=0 // pred_check_branch
    %10 = sbr.rel (0) target = $region5
  $region4: #{model_forward.1} parent=0 // pred_region
    _
  $region5: #{model_forward.1} parent=0 // pred_fallthru
    _
  // Predicated region
  $region6: #{model_forward.1} parent=0 // pred_check
    _
  $region7: #{model_forward.1} parent=0 // pred_check_branch
    %12 = sbr.rel (0) target = $region9
  $region8: #{model_forward.1} parent=0 // pred_region
    _
  $region9: #{model_forward.1} parent=0 // pred_fallthru
    _
  // Predicated region
  $region10: #{model_forward.1} parent=0 // pred_check
    _
  $region11: #{model_forward.1} parent=0 // pred_check_branch
    %14 = sbr.rel (0) target = $region13
  $region12: #{model_forward.1} parent=0 // pred_region
    _
  $region13: #{model_forward.1} parent=0 // pred_fallthru
    _
  // Predicated region
  $region14: #{model_forward.1} parent=0 // pred_check
    _
  $region15: #{model_forward.1} parent=0 // pred_check_branch
    %16 = sbr.rel (0) target = $region17
  $region16: #{model_forward.1} parent=0 // pred_region
    _
  $region17: #{model_forward.1} parent=0 // pred_fallthru
    _
  %v17 = vld [vmem:[%s0] sm:$0xff]
  %v18 = vld [vmem:[%s0 + $0x8] sm:$0xff]
  %v19 = vld [vmem:[%s0 + $0x10] sm:$0xff]
  %v20 = vld [vmem:[%s0 + $0x18] sm:$0xff]
  %v21 = vld [vmem:[%s0 + $0x20] sm:$0xff]
  %v22 = vld [vmem:[%s0 + $0x28] sm:$0xff]
  %v23 = vld [vmem:[%s0 + $0x30] sm:$0xff]
  %v24 = vld [vmem:[%s0 + $0x38] sm:$0xff]
  %v25 = vld [vmem:[%s0 + $0x40] sm:$0xff]
  %v26 = vld [vmem:[%s0 + $0x48] sm:$0xff]
  %v27 = vld [vmem:[%s0 + $0x50] sm:$0xff]
  %v28 = vld [vmem:[%s0 + $0x58] sm:$0xff]
  %v29 = vld [vmem:[%s0 + $0x60] sm:$0xff]
  %v30 = vld [vmem:[%s0 + $0x68] sm:$0xff]
  %v31 = vld [vmem:[%s0 + $0x70] sm:$0xff]
  %v32 = vld [vmem:[%s0 + $0x78] sm:$0xff]
  %v33 = vld [vmem:[%s1] sm:$0xff]
  %v34 = vld [vmem:[%s1 + $0x8] sm:$0xff]
  %v35 = vld [vmem:[%s1 + $0x10] sm:$0xff]
  %v36 = vld [vmem:[%s1 + $0x18] sm:$0xff]
  %v37 = vld [vmem:[%s1 + $0x20] sm:$0xff]
  %v38 = vld [vmem:[%s1 + $0x28] sm:$0xff]
  %v39 = vld [vmem:[%s1 + $0x30] sm:$0xff]
  %v40 = vld [vmem:[%s1 + $0x38] sm:$0xff]
  %v41 = vld [vmem:[%s1 + $0x40] sm:$0xff]
  %v42 = vld [vmem:[%s1 + $0x48] sm:$0xff]
  %v43 = vld [vmem:[%s1 + $0x50] sm:$0xff]
  %v44 = vld [vmem:[%s1 + $0x58] sm:$0xff]
  %v45 = vld [vmem:[%s1 + $0x60] sm:$0xff]
  %v46 = vld [vmem:[%s1 + $0x68] sm:$0xff]
  %v47 = vld [vmem:[%s1 + $0x70] sm:$0xff]
  %v48 = vld [vmem:[%s1 + $0x78] sm:$0xff]
  %v49 = vld [vmem:[%s1 + $0x80] sm:$0xff]
  %v50 = vld [vmem:[%s1 + $0x88] sm:$0xff]
  %v51 = vld [vmem:[%s1 + $0x90] sm:$0xff]
  %v52 = vld [vmem:[%s1 + $0x98] sm:$0xff]
  %v53 = vld [vmem:[%s1 + $0xa0] sm:$0xff]
  %v54 = vld [vmem:[%s1 + $0xa8] sm:$0xff]
  %v55 = vld [vmem:[%s1 + $0xb0] sm:$0xff]
  %v56 = vld [vmem:[%s1 + $0xb8] sm:$0xff]
  %v57 = vld [vmem:[%s1 + $0xc0] sm:$0xff]
  %v58 = vld [vmem:[%s1 + $0xc8] sm:$0xff]
  %v59 = vld [vmem:[%s1 + $0xd0] sm:$0xff]
  %v60 = vld [vmem:[%s1 + $0xd8] sm:$0xff]
  %v61 = vld [vmem:[%s1 + $0xe0] sm:$0xff]
  %v62 = vld [vmem:[%s1 + $0xe8] sm:$0xff]
  %v63 = vld [vmem:[%s1 + $0xf0] sm:$0xff]
  %v64 = vld [vmem:[%s1 + $0xf8] sm:$0xff]
  %v65 = vld [vmem:[%s1 + $0x100] sm:$0xff]
  %v66 = vld [vmem:[%s1 + $0x108] sm:$0xff]
  %v67 = vld [vmem:[%s1 + $0x110] sm:$0xff]
  %v68 = vld [vmem:[%s1 + $0x118] sm:$0xff]
  %v69 = vld [vmem:[%s1 + $0x120] sm:$0xff]
  %v70 = vld [vmem:[%s1 + $0x128] sm:$0xff]
  %v71 = vld [vmem:[%s1 + $0x130] sm:$0xff]
  %v72 = vld [vmem:[%s1 + $0x138] sm:$0xff]
  %v73 = vld [vmem:[%s1 + $0x140] sm:$0xff]
  %v74 = vld [vmem:[%s1 + $0x148] sm:$0xff]
  %v75 = vld [vmem:[%s1 + $0x150] sm:$0xff]
  %v76 = vld [vmem:[%s1 + $0x158] sm:$0xff]
  %v77 = vld [vmem:[%s1 + $0x160] sm:$0xff]
  %v78 = vld [vmem:[%s1 + $0x168] sm:$0xff]
  %v79 = vld [vmem:[%s1 + $0x170] sm:$0xff]
  %v80 = vld [vmem:[%s1 + $0x178] sm:$0xff]
  %v81 = vld [vmem:[%s1 + $0x180] sm:$0xff]
  %v82 = vld [vmem:[%s1 + $0x188] sm:$0xff]
  %v83 = vld [vmem:[%s1 + $0x190] sm:$0xff]
  %v84 = vld [vmem:[%s1 + $0x198] sm:$0xff]
  %v85 = vld [vmem:[%s1 + $0x1a0] sm:$0xff]
  %v86 = vld [vmem:[%s1 + $0x1a8] sm:$0xff]
  %v87 = vld [vmem:[%s1 + $0x1b0] sm:$0xff]
  %v88 = vld [vmem:[%s1 + $0x1b8] sm:$0xff]
  %v89 = vld [vmem:[%s1 + $0x1c0] sm:$0xff]
  %v90 = vld [vmem:[%s1 + $0x1c8] sm:$0xff]
  %v91 = vld [vmem:[%s1 + $0x1d0] sm:$0xff]
  %v92 = vld [vmem:[%s1 + $0x1d8] sm:$0xff]
  %v93 = vld [vmem:[%s1 + $0x1e0] sm:$0xff]
  %v94 = vld [vmem:[%s1 + $0x1e8] sm:$0xff]
  %v95 = vld [vmem:[%s1 + $0x1f0] sm:$0xff]
  %v96 = vld [vmem:[%s1 + $0x1f8] sm:$0xff]
  %v97 = vld [vmem:[%s1 + $0x200] sm:$0xff]
  %v98 = vld [vmem:[%s1 + $0x208] sm:$0xff]
  %v99 = vld [vmem:[%s1 + $0x210] sm:$0xff]
  %v100 = vld [vmem:[%s1 + $0x218] sm:$0xff]
  %v101 = vld [vmem:[%s1 + $0x220] sm:$0xff]
  %v102 = vld [vmem:[%s1 + $0x228] sm:$0xff]
  %v103 = vld [vmem:[%s1 + $0x230] sm:$0xff]
  %v104 = vld [vmem:[%s1 + $0x238] sm:$0xff]
  %v105 = vld [vmem:[%s1 + $0x240] sm:$0xff]
  %v106 = vld [vmem:[%s1 + $0x248] sm:$0xff]
  %v107 = vld [vmem:[%s1 + $0x250] sm:$0xff]
  %v108 = vld [vmem:[%s1 + $0x258] sm:$0xff]
  %v109 = vld [vmem:[%s1 + $0x260] sm:$0xff]
  %v110 = vld [vmem:[%s1 + $0x268] sm:$0xff]
  %v111 = vld [vmem:[%s1 + $0x270] sm:$0xff]
  %v112 = vld [vmem:[%s1 + $0x278] sm:$0xff]
  %v113 = vld [vmem:[%s1 + $0x280] sm:$0xff]
  %v114 = vld [vmem:[%s1 + $0x288] sm:$0xff]
  %v115 = vld [vmem:[%s1 + $0x290] sm:$0xff]
  %v116 = vld [vmem:[%s1 + $0x298] sm:$0xff]
  %v117 = vld [vmem:[%s1 + $0x2a0] sm:$0xff]
  %v118 = vld [vmem:[%s1 + $0x2a8] sm:$0xff]
  %v119 = vld [vmem:[%s1 + $0x2b0] sm:$0xff]
  %v120 = vld [vmem:[%s1 + $0x2b8] sm:$0xff]
  %v121 = vld [vmem:[%s1 + $0x2c0] sm:$0xff]
  %v122 = vld [vmem:[%s1 + $0x2c8] sm:$0xff]
  %v123 = vld [vmem:[%s1 + $0x2d0] sm:$0xff]
  %v124 = vld [vmem:[%s1 + $0x2d8] sm:$0xff]
  %v125 = vld [vmem:[%s1 + $0x2e0] sm:$0xff]
  %v126 = vld [vmem:[%s1 + $0x2e8] sm:$0xff]
  %v127 = vld [vmem:[%s1 + $0x2f0] sm:$0xff]
  %v128 = vld [vmem:[%s1 + $0x2f8] sm:$0xff]
  %v129 = vld [vmem:[%s1 + $0x300] sm:$0xff]
  %v130 = vld [vmem:[%s1 + $0x308] sm:$0xff]
  %v131 = vld [vmem:[%s1 + $0x310] sm:$0xff]
  %v132 = vld [vmem:[%s1 + $0x318] sm:$0xff]
  %v133 = vld [vmem:[%s1 + $0x320] sm:$0xff]
  %v134 = vld [vmem:[%s1 + $0x328] sm:$0xff]
  %v135 = vld [vmem:[%s1 + $0x330] sm:$0xff]
  %v136 = vld [vmem:[%s1 + $0x338] sm:$0xff]
  %v137 = vld [vmem:[%s1 + $0x340] sm:$0xff]
  %v138 = vld [vmem:[%s1 + $0x348] sm:$0xff]
  %v139 = vld [vmem:[%s1 + $0x350] sm:$0xff]
  %v140 = vld [vmem:[%s1 + $0x358] sm:$0xff]
  %v141 = vld [vmem:[%s1 + $0x360] sm:$0xff]
  %v142 = vld [vmem:[%s1 + $0x368] sm:$0xff]
  %v143 = vld [vmem:[%s1 + $0x370] sm:$0xff]
  %v144 = vld [vmem:[%s1 + $0x378] sm:$0xff]
  %v145 = vld [vmem:[%s1 + $0x380] sm:$0xff]
  %v146 = vld [vmem:[%s1 + $0x388] sm:$0xff]
  %v147 = vld [vmem:[%s1 + $0x390] sm:$0xff]
  %v148 = vld [vmem:[%s1 + $0x398] sm:$0xff]
  %v149 = vld [vmem:[%s1 + $0x3a0] sm:$0xff]
  %v150 = vld [vmem:[%s1 + $0x3a8] sm:$0xff]
  %v151 = vld [vmem:[%s1 + $0x3b0] sm:$0xff]
  %v152 = vld [vmem:[%s1 + $0x3b8] sm:$0xff]
  %v153 = vld [vmem:[%s1 + $0x3c0] sm:$0xff]
  %v154 = vld [vmem:[%s1 + $0x3c8] sm:$0xff]
  %v155 = vld [vmem:[%s1 + $0x3d0] sm:$0xff]
  %v156 = vld [vmem:[%s1 + $0x3d8] sm:$0xff]
  %v157 = vld [vmem:[%s1 + $0x3e0] sm:$0xff]
  %v158 = vld [vmem:[%s1 + $0x3e8] sm:$0xff]
  %v159 = vld [vmem:[%s1 + $0x3f0] sm:$0xff]
  %v160 = vld [vmem:[%s1 + $0x3f8] sm:$0xff]
  %v161 = vld [vmem:[%s1 + $0x400] sm:$0xff]
  %v162 = vld [vmem:[%s1 + $0x408] sm:$0xff]
  %v163 = vld [vmem:[%s1 + $0x410] sm:$0xff]
  %v164 = vld [vmem:[%s1 + $0x418] sm:$0xff]
  %v165 = vld [vmem:[%s1 + $0x420] sm:$0xff]
  %v166 = vld [vmem:[%s1 + $0x428] sm:$0xff]
  %v167 = vld [vmem:[%s1 + $0x430] sm:$0xff]
  %v168 = vld [vmem:[%s1 + $0x438] sm:$0xff]
  %v169 = vld [vmem:[%s1 + $0x440] sm:$0xff]
  %v170 = vld [vmem:[%s1 + $0x448] sm:$0xff]
  %v171 = vld [vmem:[%s1 + $0x450] sm:$0xff]
  %v172 = vld [vmem:[%s1 + $0x458] sm:$0xff]
  %v173 = vld [vmem:[%s1 + $0x460] sm:$0xff]
  %v174 = vld [vmem:[%s1 + $0x468] sm:$0xff]
  %v175 = vld [vmem:[%s1 + $0x470] sm:$0xff]
  %v176 = vld [vmem:[%s1 + $0x478] sm:$0xff]
  %v177 = vld [vmem:[%s1 + $0x480] sm:$0xff]
  %v178 = vld [vmem:[%s1 + $0x488] sm:$0xff]
  %v179 = vld [vmem:[%s1 + $0x490] sm:$0xff]
  %v180 = vld [vmem:[%s1 + $0x498] sm:$0xff]
  %v181 = vld [vmem:[%s1 + $0x4a0] sm:$0xff]
  %v182 = vld [vmem:[%s1 + $0x4a8] sm:$0xff]
  %v183 = vld [vmem:[%s1 + $0x4b0] sm:$0xff]
  %v184 = vld [vmem:[%s1 + $0x4b8] sm:$0xff]
  %v185 = vld [vmem:[%s1 + $0x4c0] sm:$0xff]
  %v186 = vld [vmem:[%s1 + $0x4c8] sm:$0xff]
  %v187 = vld [vmem:[%s1 + $0x4d0] sm:$0xff]
  %v188 = vld [vmem:[%s1 + $0x4d8] sm:$0xff]
  %v189 = vld [vmem:[%s1 + $0x4e0] sm:$0xff]
  %v190 = vld [vmem:[%s1 + $0x4e8] sm:$0xff]
  %v191 = vld [vmem:[%s1 + $0x4f0] sm:$0xff]
  %v192 = vld [vmem:[%s1 + $0x4f8] sm:$0xff]
  %v193 = vld [vmem:[%s1 + $0x500] sm:$0xff]
  %v194 = vld [vmem:[%s1 + $0x508] sm:$0xff]
  %v195 = vld [vmem:[%s1 + $0x510] sm:$0xff]
  %v196 = vld [vmem:[%s1 + $0x518] sm:$0xff]
  %v197 = vld [vmem:[%s1 + $0x520] sm:$0xff]
  %v198 = vld [vmem:[%s1 + $0x528] sm:$0xff]
  %v199 = vld [vmem:[%s1 + $0x530] sm:$0xff]
  %v200 = vld [vmem:[%s1 + $0x538] sm:$0xff]
  %v201 = vld [vmem:[%s1 + $0x540] sm:$0xff]
  %v202 = vld [vmem:[%s1 + $0x548] sm:$0xff]
  %v203 = vld [vmem:[%s1 + $0x550] sm:$0xff]
  %v204 = vld [vmem:[%s1 + $0x558] sm:$0xff]
  %v205 = vld [vmem:[%s1 + $0x560] sm:$0xff]
  %v206 = vld [vmem:[%s1 + $0x568] sm:$0xff]
  %v207 = vld [vmem:[%s1 + $0x570] sm:$0xff]
  %v208 = vld [vmem:[%s1 + $0x578] sm:$0xff]
  %v209 = vld [vmem:[%s1 + $0x580] sm:$0xff]
  %v210 = vld [vmem:[%s1 + $0x588] sm:$0xff]
  %v211 = vld [vmem:[%s1 + $0x590] sm:$0xff]
  %v212 = vld [vmem:[%s1 + $0x598] sm:$0xff]
  %v213 = vld [vmem:[%s1 + $0x5a0] sm:$0xff]
  %v214 = vld [vmem:[%s1 + $0x5a8] sm:$0xff]
  %v215 = vld [vmem:[%s1 + $0x5b0] sm:$0xff]
  %v216 = vld [vmem:[%s1 + $0x5b8] sm:$0xff]
  %v217 = vld [vmem:[%s1 + $0x5c0] sm:$0xff]
  %v218 = vld [vmem:[%s1 + $0x5c8] sm:$0xff]
  %v219 = vld [vmem:[%s1 + $0x5d0] sm:$0xff]
  %v220 = vld [vmem:[%s1 + $0x5d8] sm:$0xff]
  %v221 = vld [vmem:[%s1 + $0x5e0] sm:$0xff]
  %v222 = vld [vmem:[%s1 + $0x5e8] sm:$0xff]
  %v223 = vld [vmem:[%s1 + $0x5f0] sm:$0xff]
  %v224 = vld [vmem:[%s1 + $0x5f8] sm:$0xff]
  %v225 = vld [vmem:[%s1 + $0x600] sm:$0xff]
  %v226 = vld [vmem:[%s1 + $0x608] sm:$0xff]
  %v227 = vld [vmem:[%s1 + $0x610] sm:$0xff]
  %v228 = vld [vmem:[%s1 + $0x618] sm:$0xff]
  %v229 = vld [vmem:[%s1 + $0x620] sm:$0xff]
  %v230 = vld [vmem:[%s1 + $0x628] sm:$0xff]
  %v231 = vld [vmem:[%s1 + $0x630] sm:$0xff]
  %v232 = vld [vmem:[%s1 + $0x638] sm:$0xff]
  %v233 = vld [vmem:[%s1 + $0x640] sm:$0xff]
  %v234 = vld [vmem:[%s1 + $0x648] sm:$0xff]
  %v235 = vld [vmem:[%s1 + $0x650] sm:$0xff]
  %v236 = vld [vmem:[%s1 + $0x658] sm:$0xff]
  %v237 = vld [vmem:[%s1 + $0x660] sm:$0xff]
  %v238 = vld [vmem:[%s1 + $0x668] sm:$0xff]
  %v239 = vld [vmem:[%s1 + $0x670] sm:$0xff]
  %v240 = vld [vmem:[%s1 + $0x678] sm:$0xff]
  %v241 = vld [vmem:[%s1 + $0x680] sm:$0xff]
  %v242 = vld [vmem:[%s1 + $0x688] sm:$0xff]
  %v243 = vld [vmem:[%s1 + $0x690] sm:$0xff]
  %v244 = vld [vmem:[%s1 + $0x698] sm:$0xff]
  %v245 = vld [vmem:[%s1 + $0x6a0] sm:$0xff]
  %v246 = vld [vmem:[%s1 + $0x6a8] sm:$0xff]
  %v247 = vld [vmem:[%s1 + $0x6b0] sm:$0xff]
  %v248 = vld [vmem:[%s1 + $0x6b8] sm:$0xff]
  %v249 = vld [vmem:[%s1 + $0x6c0] sm:$0xff]
  %v250 = vld [vmem:[%s1 + $0x6c8] sm:$0xff]
  %v251 = vld [vmem:[%s1 + $0x6d0] sm:$0xff]
  %v252 = vld [vmem:[%s1 + $0x6d8] sm:$0xff]
  %v253 = vld [vmem:[%s1 + $0x6e0] sm:$0xff]
  %v254 = vld [vmem:[%s1 + $0x6e8] sm:$0xff]
  %v255 = vld [vmem:[%s1 + $0x6f0] sm:$0xff]
  %v256 = vld [vmem:[%s1 + $0x6f8] sm:$0xff]
  %v257 = vld [vmem:[%s1 + $0x700] sm:$0xff]
  %v258 = vld [vmem:[%s1 + $0x708] sm:$0xff]
  %v259 = vld [vmem:[%s1 + $0x710] sm:$0xff]
  %v260 = vld [vmem:[%s1 + $0x718] sm:$0xff]
  %v261 = vld [vmem:[%s1 + $0x720] sm:$0xff]
  %v262 = vld [vmem:[%s1 + $0x728] sm:$0xff]
  %v263 = vld [vmem:[%s1 + $0x730] sm:$0xff]
  %v264 = vld [vmem:[%s1 + $0x738] sm:$0xff]
  %v265 = vld [vmem:[%s1 + $0x740] sm:$0xff]
  %v266 = vld [vmem:[%s1 + $0x748] sm:$0xff]
  %v267 = vld [vmem:[%s1 + $0x750] sm:$0xff]
  %v268 = vld [vmem:[%s1 + $0x758] sm:$0xff]
  %v269 = vld [vmem:[%s1 + $0x760] sm:$0xff]
  %v270 = vld [vmem:[%s1 + $0x768] sm:$0xff]
  %v271 = vld [vmem:[%s1 + $0x770] sm:$0xff]
  %v272 = vld [vmem:[%s1 + $0x778] sm:$0xff]
  %v273 = vld [vmem:[%s1 + $0x780] sm:$0xff]
  %v274 = vld [vmem:[%s1 + $0x788] sm:$0xff]
  %v275 = vld [vmem:[%s1 + $0x790] sm:$0xff]
  %v276 = vld [vmem:[%s1 + $0x798] sm:$0xff]
  %v277 = vld [vmem:[%s1 + $0x7a0] sm:$0xff]
  %v278 = vld [vmem:[%s1 + $0x7a8] sm:$0xff]
  %v279 = vld [vmem:[%s1 + $0x7b0] sm:$0xff]
  %v280 = vld [vmem:[%s1 + $0x7b8] sm:$0xff]
  %v281 = vld [vmem:[%s1 + $0x7c0] sm:$0xff]
  %v282 = vld [vmem:[%s1 + $0x7c8] sm:$0xff]
  %v283 = vld [vmem:[%s1 + $0x7d0] sm:$0xff]
  %v284 = vld [vmem:[%s1 + $0x7d8] sm:$0xff]
  %v285 = vld [vmem:[%s1 + $0x7e0] sm:$0xff]
  %v286 = vld [vmem:[%s1 + $0x7e8] sm:$0xff]
  %v287 = vld [vmem:[%s1 + $0x7f0] sm:$0xff]
  %v288 = vld [vmem:[%s1 + $0x7f8] sm:$0xff]
  %v289 = vld [vmem:[%s2] sm:$0x1]
  %v291 = vlaneseq
  %v292 = vshrl.u32 %v291, 7
  %v293 = vsub.s32 0, %v292
  %v294 = vrot.slane %v289, %v293
  %296 = vmatprep.subr.mxu0 0.0
  %297 = vmatpush1.msra.mxu0 %v48
  %298 = vmatprep.subr.mxu0 0.0
  %299 = vmatpush1.msra.mxu0 %v47
  %300 = vmatprep.subr.mxu0 0.0
  %301 = vmatpush1.msra.mxu0 %v46
  %302 = vmatprep.subr.mxu0 0.0
  %303 = vmatpush1.msra.mxu0 %v45
  %304 = vmatprep.subr.mxu0 0.0
  %305 = vmatpush1.msra.mxu0 %v44
  %306 = vmatprep.subr.mxu0 0.0
  %307 = vmatpush1.msra.mxu0 %v43
  %308 = vmatprep.subr.mxu0 0.0
  %309 = vmatpush1.msra.mxu0 %v42
  %310 = vmatprep.subr.mxu0 0.0
  %311 = vmatpush1.msra.mxu0 %v41
  %312 = vmatprep.subr.mxu0 0.0
  %313 = vmatpush1.msra.mxu0 %v40
  %314 = vmatprep.subr.mxu0 0.0
  %315 = vmatpush1.msra.mxu0 %v39
  %316 = vmatprep.subr.mxu0 0.0
  %317 = vmatpush1.msra.mxu0 %v38
  %318 = vmatprep.subr.mxu0 0.0
  %319 = vmatpush1.msra.mxu0 %v37
  %320 = vmatprep.subr.mxu0 0.0
  %321 = vmatpush1.msra.mxu0 %v36
  %322 = vmatprep.subr.mxu0 0.0
  %323 = vmatpush1.msra.mxu0 %v35
  %324 = vmatprep.subr.mxu0 0.0
  %325 = vmatpush1.msra.mxu0 %v34
  %326 = vmatprep.subr.mxu0 0.0
  %327 = vmatpush1.msra.mxu0 %v33
  %328 = vmatprep.subr.mxu0 0.0
  %329 = vmatpush2.msra.mxu0 %v64
  %330 = vmatprep.subr.mxu0 0.0
  %331 = vmatpush2.msra.mxu0 %v63
  %332 = vmatprep.subr.mxu0 0.0
  %333 = vmatpush2.msra.mxu0 %v62
  %334 = vmatprep.subr.mxu0 0.0
  %335 = vmatpush2.msra.mxu0 %v61
  %336 = vmatprep.subr.mxu0 0.0
  %337 = vmatpush2.msra.mxu0 %v60
  %338 = vmatprep.subr.mxu0 0.0
  %339 = vmatpush2.msra.mxu0 %v59
  %340 = vmatprep.subr.mxu0 0.0
  %341 = vmatpush2.msra.mxu0 %v58
  %342 = vmatprep.subr.mxu0 0.0
  %343 = vmatpush2.msra.mxu0 %v57
  %344 = vmatprep.subr.mxu0 0.0
  %345 = vmatpush2.msra.mxu0 %v56
  %346 = vmatprep.subr.mxu0 0.0
  %347 = vmatpush2.msra.mxu0 %v55
  %348 = vmatprep.subr.mxu0 0.0
  %349 = vmatpush2.msra.mxu0 %v54
  %350 = vmatprep.subr.mxu0 0.0
  %351 = vmatpush2.msra.mxu0 %v53
  %352 = vmatprep.subr.mxu0 0.0
  %353 = vmatpush2.msra.mxu0 %v52
  %354 = vmatprep.subr.mxu0 0.0
  %355 = vmatpush2.msra.mxu0 %v51
  %356 = vmatprep.subr.mxu0 0.0
  %357 = vmatpush2.msra.mxu0 %v50
  %358 = vmatprep.subr.mxu0 0.0
  %359 = vmatpush2.msra.mxu0 %v49
  %360 = vmatprep.mubr.f32.mxu0 %v18
  %361 = vmatmul.mubr.f32.gmra.mxu0 %v17
  %v362 = vpop.f32.mrf.mxu0
  %v363 = vadd.f32 %v294, %v362
  %v364 = vpop.f32.mrf.mxu0
  %365 = vdwg.mxu0
  %366 = vmatprep.subr.mxu0 0.0
  %367 = vmatpush1.msra.mxu0 %v80
  %368 = vmatprep.subr.mxu0 0.0
  %369 = vmatpush1.msra.mxu0 %v79
  %370 = vmatprep.subr.mxu0 0.0
  %371 = vmatpush1.msra.mxu0 %v78
  %372 = vmatprep.subr.mxu0 0.0
  %373 = vmatpush1.msra.mxu0 %v77
  %374 = vmatprep.subr.mxu0 0.0
  %375 = vmatpush1.msra.mxu0 %v76
  %376 = vmatprep.subr.mxu0 0.0
  %377 = vmatpush1.msra.mxu0 %v75
  %378 = vmatprep.subr.mxu0 0.0
  %379 = vmatpush1.msra.mxu0 %v74
  %380 = vmatprep.subr.mxu0 0.0
  %381 = vmatpush1.msra.mxu0 %v73
  %382 = vmatprep.subr.mxu0 0.0
  %383 = vmatpush1.msra.mxu0 %v72
  %384 = vmatprep.subr.mxu0 0.0
  %385 = vmatpush1.msra.mxu0 %v71
  %386 = vmatprep.subr.mxu0 0.0
  %387 = vmatpush1.msra.mxu0 %v70
  %388 = vmatprep.subr.mxu0 0.0
  %389 = vmatpush1.msra.mxu0 %v69
  %390 = vmatprep.subr.mxu0 0.0
  %391 = vmatpush1.msra.mxu0 %v68
  %392 = vmatprep.subr.mxu0 0.0
  %393 = vmatpush1.msra.mxu0 %v67
  %394 = vmatprep.subr.mxu0 0.0
  %395 = vmatpush1.msra.mxu0 %v66
  %396 = vmatprep.subr.mxu0 0.0
  %397 = vmatpush1.msra.mxu0 %v65
  %398 = vmatprep.subr.mxu0 0.0
  %399 = vmatpush2.msra.mxu0 %v96
  %400 = vmatprep.subr.mxu0 0.0
  %401 = vmatpush2.msra.mxu0 %v95
  %402 = vmatprep.subr.mxu0 0.0
  %403 = vmatpush2.msra.mxu0 %v94
  %404 = vmatprep.subr.mxu0 0.0
  %405 = vmatpush2.msra.mxu0 %v93
  %406 = vmatprep.subr.mxu0 0.0
  %407 = vmatpush2.msra.mxu0 %v92
  %408 = vmatprep.subr.mxu0 0.0
  %409 = vmatpush2.msra.mxu0 %v91
  %410 = vmatprep.subr.mxu0 0.0
  %411 = vmatpush2.msra.mxu0 %v90
  %412 = vmatprep.subr.mxu0 0.0
  %413 = vmatpush2.msra.mxu0 %v89
  %414 = vmatprep.subr.mxu0 0.0
  %415 = vmatpush2.msra.mxu0 %v88
  %416 = vmatprep.subr.mxu0 0.0
  %417 = vmatpush2.msra.mxu0 %v87
  %418 = vmatprep.subr.mxu0 0.0
  %419 = vmatpush2.msra.mxu0 %v86
  %420 = vmatprep.subr.mxu0 0.0
  %421 = vmatpush2.msra.mxu0 %v85
  %422 = vmatprep.subr.mxu0 0.0
  %423 = vmatpush2.msra.mxu0 %v84
  %424 = vmatprep.subr.mxu0 0.0
  %425 = vmatpush2.msra.mxu0 %v83
  %426 = vmatprep.subr.mxu0 0.0
  %427 = vmatpush2.msra.mxu0 %v82
  %428 = vmatprep.subr.mxu0 0.0
  %429 = vmatpush2.msra.mxu0 %v81
  %430 = vmatprep.mubr.f32.mxu0 %v20
  %431 = vmatmul.mubr.f32.gmra.mxu0 %v19
  %v432 = vpop.f32.mrf.mxu0
  %v433 = vadd.f32 %v363, %v432
  %v434 = vpop.f32.mrf.mxu0
  %435 = vdwg.mxu0
  %436 = vmatprep.subr.mxu0 0.0
  %437 = vmatpush1.msra.mxu0 %v112
  %438 = vmatprep.subr.mxu0 0.0
  %439 = vmatpush1.msra.mxu0 %v111
  %440 = vmatprep.subr.mxu0 0.0
  %441 = vmatpush1.msra.mxu0 %v110
  %442 = vmatprep.subr.mxu0 0.0
  %443 = vmatpush1.msra.mxu0 %v109
  %444 = vmatprep.subr.mxu0 0.0
  %445 = vmatpush1.msra.mxu0 %v108
  %446 = vmatprep.subr.mxu0 0.0
  %447 = vmatpush1.msra.mxu0 %v107
  %448 = vmatprep.subr.mxu0 0.0
  %449 = vmatpush1.msra.mxu0 %v106
  %450 = vmatprep.subr.mxu0 0.0
  %451 = vmatpush1.msra.mxu0 %v105
  %452 = vmatprep.subr.mxu0 0.0
  %453 = vmatpush1.msra.mxu0 %v104
  %454 = vmatprep.subr.mxu0 0.0
  %455 = vmatpush1.msra.mxu0 %v103
  %456 = vmatprep.subr.mxu0 0.0
  %457 = vmatpush1.msra.mxu0 %v102
  %458 = vmatprep.subr.mxu0 0.0
  %459 = vmatpush1.msra.mxu0 %v101
  %460 = vmatprep.subr.mxu0 0.0
  %461 = vmatpush1.msra.mxu0 %v100
  %462 = vmatprep.subr.mxu0 0.0
  %463 = vmatpush1.msra.mxu0 %v99
  %464 = vmatprep.subr.mxu0 0.0
  %465 = vmatpush1.msra.mxu0 %v98
  %466 = vmatprep.subr.mxu0 0.0
  %467 = vmatpush1.msra.mxu0 %v97
  %468 = vmatprep.subr.mxu0 0.0
  %469 = vmatpush2.msra.mxu0 %v128
  %470 = vmatprep.subr.mxu0 0.0
  %471 = vmatpush2.msra.mxu0 %v127
  %472 = vmatprep.subr.mxu0 0.0
  %473 = vmatpush2.msra.mxu0 %v126
  %474 = vmatprep.subr.mxu0 0.0
  %475 = vmatpush2.msra.mxu0 %v125
  %476 = vmatprep.subr.mxu0 0.0
  %477 = vmatpush2.msra.mxu0 %v124
  %478 = vmatprep.subr.mxu0 0.0
  %479 = vmatpush2.msra.mxu0 %v123
  %480 = vmatprep.subr.mxu0 0.0
  %481 = vmatpush2.msra.mxu0 %v122
  %482 = vmatprep.subr.mxu0 0.0
  %483 = vmatpush2.msra.mxu0 %v121
  %484 = vmatprep.subr.mxu0 0.0
  %485 = vmatpush2.msra.mxu0 %v120
  %486 = vmatprep.subr.mxu0 0.0
  %487 = vmatpush2.msra.mxu0 %v119
  %488 = vmatprep.subr.mxu0 0.0
  %489 = vmatpush2.msra.mxu0 %v118
  %490 = vmatprep.subr.mxu0 0.0
  %491 = vmatpush2.msra.mxu0 %v117
  %492 = vmatprep.subr.mxu0 0.0
  %493 = vmatpush2.msra.mxu0 %v116
  %494 = vmatprep.subr.mxu0 0.0
  %495 = vmatpush2.msra.mxu0 %v115
  %496 = vmatprep.subr.mxu0 0.0
  %497 = vmatpush2.msra.mxu0 %v114
  %498 = vmatprep.subr.mxu0 0.0
  %499 = vmatpush2.msra.mxu0 %v113
  %500 = vmatprep.mubr.f32.mxu0 %v22
  %501 = vmatmul.mubr.f32.gmra.mxu0 %v21
  %v502 = vpop.f32.mrf.mxu0
  %v503 = vadd.f32 %v433, %v502
  %v504 = vpop.f32.mrf.mxu0
  %505 = vdwg.mxu0
  %506 = vmatprep.subr.mxu0 0.0
  %507 = vmatpush1.msra.mxu0 %v144
  %508 = vmatprep.subr.mxu0 0.0
  %509 = vmatpush1.msra.mxu0 %v143
  %510 = vmatprep.subr.mxu0 0.0
  %511 = vmatpush1.msra.mxu0 %v142
  %512 = vmatprep.subr.mxu0 0.0
  %513 = vmatpush1.msra.mxu0 %v141
  %514 = vmatprep.subr.mxu0 0.0
  %515 = vmatpush1.msra.mxu0 %v140
  %516 = vmatprep.subr.mxu0 0.0
  %517 = vmatpush1.msra.mxu0 %v139
  %518 = vmatprep.subr.mxu0 0.0
  %519 = vmatpush1.msra.mxu0 %v138
  %520 = vmatprep.subr.mxu0 0.0
  %521 = vmatpush1.msra.mxu0 %v137
  %522 = vmatprep.subr.mxu0 0.0
  %523 = vmatpush1.msra.mxu0 %v136
  %524 = vmatprep.subr.mxu0 0.0
  %525 = vmatpush1.msra.mxu0 %v135
  %526 = vmatprep.subr.mxu0 0.0
  %527 = vmatpush1.msra.mxu0 %v134
  %528 = vmatprep.subr.mxu0 0.0
  %529 = vmatpush1.msra.mxu0 %v133
  %530 = vmatprep.subr.mxu0 0.0
  %531 = vmatpush1.msra.mxu0 %v132
  %532 = vmatprep.subr.mxu0 0.0
  %533 = vmatpush1.msra.mxu0 %v131
  %534 = vmatprep.subr.mxu0 0.0
  %535 = vmatpush1.msra.mxu0 %v130
  %536 = vmatprep.subr.mxu0 0.0
  %537 = vmatpush1.msra.mxu0 %v129
  %538 = vmatprep.subr.mxu0 0.0
  %539 = vmatpush2.msra.mxu0 %v160
  %540 = vmatprep.subr.mxu0 0.0
  %541 = vmatpush2.msra.mxu0 %v159
  %542 = vmatprep.subr.mxu0 0.0
  %543 = vmatpush2.msra.mxu0 %v158
  %544 = vmatprep.subr.mxu0 0.0
  %545 = vmatpush2.msra.mxu0 %v157
  %546 = vmatprep.subr.mxu0 0.0
  %547 = vmatpush2.msra.mxu0 %v156
  %548 = vmatprep.subr.mxu0 0.0
  %549 = vmatpush2.msra.mxu0 %v155
  %550 = vmatprep.subr.mxu0 0.0
  %551 = vmatpush2.msra.mxu0 %v154
  %552 = vmatprep.subr.mxu0 0.0
  %553 = vmatpush2.msra.mxu0 %v153
  %554 = vmatprep.subr.mxu0 0.0
  %555 = vmatpush2.msra.mxu0 %v152
  %556 = vmatprep.subr.mxu0 0.0
  %557 = vmatpush2.msra.mxu0 %v151
  %558 = vmatprep.subr.mxu0 0.0
  %559 = vmatpush2.msra.mxu0 %v150
  %560 = vmatprep.subr.mxu0 0.0
  %561 = vmatpush2.msra.mxu0 %v149
  %562 = vmatprep.subr.mxu0 0.0
  %563 = vmatpush2.msra.mxu0 %v148
  %564 = vmatprep.subr.mxu0 0.0
  %565 = vmatpush2.msra.mxu0 %v147
  %566 = vmatprep.subr.mxu0 0.0
  %567 = vmatpush2.msra.mxu0 %v146
  %568 = vmatprep.subr.mxu0 0.0
  %569 = vmatpush2.msra.mxu0 %v145
  %570 = vmatprep.mubr.f32.mxu0 %v24
  %571 = vmatmul.mubr.f32.gmra.mxu0 %v23
  %v572 = vpop.f32.mrf.mxu0
  %v573 = vadd.f32 %v503, %v572
  %v574 = vpop.f32.mrf.mxu0
  %575 = vdwg.mxu0
  %576 = vmatprep.subr.mxu0 0.0
  %577 = vmatpush1.msra.mxu0 %v176
  %578 = vmatprep.subr.mxu0 0.0
  %579 = vmatpush1.msra.mxu0 %v175
  %580 = vmatprep.subr.mxu0 0.0
  %581 = vmatpush1.msra.mxu0 %v174
  %582 = vmatprep.subr.mxu0 0.0
  %583 = vmatpush1.msra.mxu0 %v173
  %584 = vmatprep.subr.mxu0 0.0
  %585 = vmatpush1.msra.mxu0 %v172
  %586 = vmatprep.subr.mxu0 0.0
  %587 = vmatpush1.msra.mxu0 %v171
  %588 = vmatprep.subr.mxu0 0.0
  %589 = vmatpush1.msra.mxu0 %v170
  %590 = vmatprep.subr.mxu0 0.0
  %591 = vmatpush1.msra.mxu0 %v169
  %592 = vmatprep.subr.mxu0 0.0
  %593 = vmatpush1.msra.mxu0 %v168
  %594 = vmatprep.subr.mxu0 0.0
  %595 = vmatpush1.msra.mxu0 %v167
  %596 = vmatprep.subr.mxu0 0.0
  %597 = vmatpush1.msra.mxu0 %v166
  %598 = vmatprep.subr.mxu0 0.0
  %599 = vmatpush1.msra.mxu0 %v165
  %600 = vmatprep.subr.mxu0 0.0
  %601 = vmatpush1.msra.mxu0 %v164
  %602 = vmatprep.subr.mxu0 0.0
  %603 = vmatpush1.msra.mxu0 %v163
  %604 = vmatprep.subr.mxu0 0.0
  %605 = vmatpush1.msra.mxu0 %v162
  %606 = vmatprep.subr.mxu0 0.0
  %607 = vmatpush1.msra.mxu0 %v161
  %608 = vmatprep.subr.mxu0 0.0
  %609 = vmatpush2.msra.mxu0 %v192
  %610 = vmatprep.subr.mxu0 0.0
  %611 = vmatpush2.msra.mxu0 %v191
  %612 = vmatprep.subr.mxu0 0.0
  %613 = vmatpush2.msra.mxu0 %v190
  %614 = vmatprep.subr.mxu0 0.0
  %615 = vmatpush2.msra.mxu0 %v189
  %616 = vmatprep.subr.mxu0 0.0
  %617 = vmatpush2.msra.mxu0 %v188
  %618 = vmatprep.subr.mxu0 0.0
  %619 = vmatpush2.msra.mxu0 %v187
  %620 = vmatprep.subr.mxu0 0.0
  %621 = vmatpush2.msra.mxu0 %v186
  %622 = vmatprep.subr.mxu0 0.0
  %623 = vmatpush2.msra.mxu0 %v185
  %624 = vmatprep.subr.mxu0 0.0
  %625 = vmatpush2.msra.mxu0 %v184
  %626 = vmatprep.subr.mxu0 0.0
  %627 = vmatpush2.msra.mxu0 %v183
  %628 = vmatprep.subr.mxu0 0.0
  %629 = vmatpush2.msra.mxu0 %v182
  %630 = vmatprep.subr.mxu0 0.0
  %631 = vmatpush2.msra.mxu0 %v181
  %632 = vmatprep.subr.mxu0 0.0
  %633 = vmatpush2.msra.mxu0 %v180
  %634 = vmatprep.subr.mxu0 0.0
  %635 = vmatpush2.msra.mxu0 %v179
  %636 = vmatprep.subr.mxu0 0.0
  %637 = vmatpush2.msra.mxu0 %v178
  %638 = vmatprep.subr.mxu0 0.0
  %639 = vmatpush2.msra.mxu0 %v177
  %640 = vmatprep.mubr.f32.mxu0 %v26
  %641 = vmatmul.mubr.f32.gmra.mxu0 %v25
  %v642 = vpop.f32.mrf.mxu0
  %v643 = vadd.f32 %v573, %v642
  %v644 = vpop.f32.mrf.mxu0
  %645 = vdwg.mxu0
  %646 = vmatprep.subr.mxu0 0.0
  %647 = vmatpush1.msra.mxu0 %v208
  %648 = vmatprep.subr.mxu0 0.0
  %649 = vmatpush1.msra.mxu0 %v207
  %650 = vmatprep.subr.mxu0 0.0
  %651 = vmatpush1.msra.mxu0 %v206
  %652 = vmatprep.subr.mxu0 0.0
  %653 = vmatpush1.msra.mxu0 %v205
  %654 = vmatprep.subr.mxu0 0.0
  %655 = vmatpush1.msra.mxu0 %v204
  %656 = vmatprep.subr.mxu0 0.0
  %657 = vmatpush1.msra.mxu0 %v203
  %658 = vmatprep.subr.mxu0 0.0
  %659 = vmatpush1.msra.mxu0 %v202
  %660 = vmatprep.subr.mxu0 0.0
  %661 = vmatpush1.msra.mxu0 %v201
  %662 = vmatprep.subr.mxu0 0.0
  %663 = vmatpush1.msra.mxu0 %v200
  %664 = vmatprep.subr.mxu0 0.0
  %665 = vmatpush1.msra.mxu0 %v199
  %666 = vmatprep.subr.mxu0 0.0
  %667 = vmatpush1.msra.mxu0 %v198
  %668 = vmatprep.subr.mxu0 0.0
  %669 = vmatpush1.msra.mxu0 %v197
  %670 = vmatprep.subr.mxu0 0.0
  %671 = vmatpush1.msra.mxu0 %v196
  %672 = vmatprep.subr.mxu0 0.0
  %673 = vmatpush1.msra.mxu0 %v195
  %674 = vmatprep.subr.mxu0 0.0
  %675 = vmatpush1.msra.mxu0 %v194
  %676 = vmatprep.subr.mxu0 0.0
  %677 = vmatpush1.msra.mxu0 %v193
  %678 = vmatprep.subr.mxu0 0.0
  %679 = vmatpush2.msra.mxu0 %v224
  %680 = vmatprep.subr.mxu0 0.0
  %681 = vmatpush2.msra.mxu0 %v223
  %682 = vmatprep.subr.mxu0 0.0
  %683 = vmatpush2.msra.mxu0 %v222
  %684 = vmatprep.subr.mxu0 0.0
  %685 = vmatpush2.msra.mxu0 %v221
  %686 = vmatprep.subr.mxu0 0.0
  %687 = vmatpush2.msra.mxu0 %v220
  %688 = vmatprep.subr.mxu0 0.0
  %689 = vmatpush2.msra.mxu0 %v219
  %690 = vmatprep.subr.mxu0 0.0
  %691 = vmatpush2.msra.mxu0 %v218
  %692 = vmatprep.subr.mxu0 0.0
  %693 = vmatpush2.msra.mxu0 %v217
  %694 = vmatprep.subr.mxu0 0.0
  %695 = vmatpush2.msra.mxu0 %v216
  %696 = vmatprep.subr.mxu0 0.0
  %697 = vmatpush2.msra.mxu0 %v215
  %698 = vmatprep.subr.mxu0 0.0
  %699 = vmatpush2.msra.mxu0 %v214
  %700 = vmatprep.subr.mxu0 0.0
  %701 = vmatpush2.msra.mxu0 %v213
  %702 = vmatprep.subr.mxu0 0.0
  %703 = vmatpush2.msra.mxu0 %v212
  %704 = vmatprep.subr.mxu0 0.0
  %705 = vmatpush2.msra.mxu0 %v211
  %706 = vmatprep.subr.mxu0 0.0
  %707 = vmatpush2.msra.mxu0 %v210
  %708 = vmatprep.subr.mxu0 0.0
  %709 = vmatpush2.msra.mxu0 %v209
  %710 = vmatprep.mubr.f32.mxu0 %v28
  %711 = vmatmul.mubr.f32.gmra.mxu0 %v27
  %v712 = vpop.f32.mrf.mxu0
  %v713 = vadd.f32 %v643, %v712
  %v714 = vpop.f32.mrf.mxu0
  %715 = vdwg.mxu0
  %716 = vmatprep.subr.mxu0 0.0
  %717 = vmatpush1.msra.mxu0 %v240
  %718 = vmatprep.subr.mxu0 0.0
  %719 = vmatpush1.msra.mxu0 %v239
  %720 = vmatprep.subr.mxu0 0.0
  %721 = vmatpush1.msra.mxu0 %v238
  %722 = vmatprep.subr.mxu0 0.0
  %723 = vmatpush1.msra.mxu0 %v237
  %724 = vmatprep.subr.mxu0 0.0
  %725 = vmatpush1.msra.mxu0 %v236
  %726 = vmatprep.subr.mxu0 0.0
  %727 = vmatpush1.msra.mxu0 %v235
  %728 = vmatprep.subr.mxu0 0.0
  %729 = vmatpush1.msra.mxu0 %v234
  %730 = vmatprep.subr.mxu0 0.0
  %731 = vmatpush1.msra.mxu0 %v233
  %732 = vmatprep.subr.mxu0 0.0
  %733 = vmatpush1.msra.mxu0 %v232
  %734 = vmatprep.subr.mxu0 0.0
  %735 = vmatpush1.msra.mxu0 %v231
  %736 = vmatprep.subr.mxu0 0.0
  %737 = vmatpush1.msra.mxu0 %v230
  %738 = vmatprep.subr.mxu0 0.0
  %739 = vmatpush1.msra.mxu0 %v229
  %740 = vmatprep.subr.mxu0 0.0
  %741 = vmatpush1.msra.mxu0 %v228
  %742 = vmatprep.subr.mxu0 0.0
  %743 = vmatpush1.msra.mxu0 %v227
  %744 = vmatprep.subr.mxu0 0.0
  %745 = vmatpush1.msra.mxu0 %v226
  %746 = vmatprep.subr.mxu0 0.0
  %747 = vmatpush1.msra.mxu0 %v225
  %748 = vmatprep.subr.mxu0 0.0
  %749 = vmatpush2.msra.mxu0 %v256
  %750 = vmatprep.subr.mxu0 0.0
  %751 = vmatpush2.msra.mxu0 %v255
  %752 = vmatprep.subr.mxu0 0.0
  %753 = vmatpush2.msra.mxu0 %v254
  %754 = vmatprep.subr.mxu0 0.0
  %755 = vmatpush2.msra.mxu0 %v253
  %756 = vmatprep.subr.mxu0 0.0
  %757 = vmatpush2.msra.mxu0 %v252
  %758 = vmatprep.subr.mxu0 0.0
  %759 = vmatpush2.msra.mxu0 %v251
  %760 = vmatprep.subr.mxu0 0.0
  %761 = vmatpush2.msra.mxu0 %v250
  %762 = vmatprep.subr.mxu0 0.0
  %763 = vmatpush2.msra.mxu0 %v249
  %764 = vmatprep.subr.mxu0 0.0
  %765 = vmatpush2.msra.mxu0 %v248
  %766 = vmatprep.subr.mxu0 0.0
  %767 = vmatpush2.msra.mxu0 %v247
  %768 = vmatprep.subr.mxu0 0.0
  %769 = vmatpush2.msra.mxu0 %v246
  %770 = vmatprep.subr.mxu0 0.0
  %771 = vmatpush2.msra.mxu0 %v245
  %772 = vmatprep.subr.mxu0 0.0
  %773 = vmatpush2.msra.mxu0 %v244
  %774 = vmatprep.subr.mxu0 0.0
  %775 = vmatpush2.msra.mxu0 %v243
  %776 = vmatprep.subr.mxu0 0.0
  %777 = vmatpush2.msra.mxu0 %v242
  %778 = vmatprep.subr.mxu0 0.0
  %779 = vmatpush2.msra.mxu0 %v241
  %780 = vmatprep.mubr.f32.mxu0 %v30
  %781 = vmatmul.mubr.f32.gmra.mxu0 %v29
  %v782 = vpop.f32.mrf.mxu0
  %v783 = vadd.f32 %v713, %v782
  %v784 = vpop.f32.mrf.mxu0
  %785 = vdwg.mxu0
  %786 = vmatprep.subr.mxu0 0.0
  %787 = vmatpush1.msra.mxu0 %v272
  %788 = vmatprep.subr.mxu0 0.0
  %789 = vmatpush1.msra.mxu0 %v271
  %790 = vmatprep.subr.mxu0 0.0
  %791 = vmatpush1.msra.mxu0 %v270
  %792 = vmatprep.subr.mxu0 0.0
  %793 = vmatpush1.msra.mxu0 %v269
  %794 = vmatprep.subr.mxu0 0.0
  %795 = vmatpush1.msra.mxu0 %v268
  %796 = vmatprep.subr.mxu0 0.0
  %797 = vmatpush1.msra.mxu0 %v267
  %798 = vmatprep.subr.mxu0 0.0
  %799 = vmatpush1.msra.mxu0 %v266
  %800 = vmatprep.subr.mxu0 0.0
  %801 = vmatpush1.msra.mxu0 %v265
  %802 = vmatprep.subr.mxu0 0.0
  %803 = vmatpush1.msra.mxu0 %v264
  %804 = vmatprep.subr.mxu0 0.0
  %805 = vmatpush1.msra.mxu0 %v263
  %806 = vmatprep.subr.mxu0 0.0
  %807 = vmatpush1.msra.mxu0 %v262
  %808 = vmatprep.subr.mxu0 0.0
  %809 = vmatpush1.msra.mxu0 %v261
  %810 = vmatprep.subr.mxu0 0.0
  %811 = vmatpush1.msra.mxu0 %v260
  %812 = vmatprep.subr.mxu0 0.0
  %813 = vmatpush1.msra.mxu0 %v259
  %814 = vmatprep.subr.mxu0 0.0
  %815 = vmatpush1.msra.mxu0 %v258
  %816 = vmatprep.subr.mxu0 0.0
  %817 = vmatpush1.msra.mxu0 %v257
  %818 = vmatprep.subr.mxu0 0.0
  %819 = vmatpush2.msra.mxu0 %v288
  %820 = vmatprep.subr.mxu0 0.0
  %821 = vmatpush2.msra.mxu0 %v287
  %822 = vmatprep.subr.mxu0 0.0
  %823 = vmatpush2.msra.mxu0 %v286
  %824 = vmatprep.subr.mxu0 0.0
  %825 = vmatpush2.msra.mxu0 %v285
  %826 = vmatprep.subr.mxu0 0.0
  %827 = vmatpush2.msra.mxu0 %v284
  %828 = vmatprep.subr.mxu0 0.0
  %829 = vmatpush2.msra.mxu0 %v283
  %830 = vmatprep.subr.mxu0 0.0
  %831 = vmatpush2.msra.mxu0 %v282
  %832 = vmatprep.subr.mxu0 0.0
  %833 = vmatpush2.msra.mxu0 %v281
  %834 = vmatprep.subr.mxu0 0.0
  %835 = vmatpush2.msra.mxu0 %v280
  %836 = vmatprep.subr.mxu0 0.0
  %837 = vmatpush2.msra.mxu0 %v279
  %838 = vmatprep.subr.mxu0 0.0
  %839 = vmatpush2.msra.mxu0 %v278
  %840 = vmatprep.subr.mxu0 0.0
  %841 = vmatpush2.msra.mxu0 %v277
  %842 = vmatprep.subr.mxu0 0.0
  %843 = vmatpush2.msra.mxu0 %v276
  %844 = vmatprep.subr.mxu0 0.0
  %845 = vmatpush2.msra.mxu0 %v275
  %846 = vmatprep.subr.mxu0 0.0
  %847 = vmatpush2.msra.mxu0 %v274
  %848 = vmatprep.subr.mxu0 0.0
  %849 = vmatpush2.msra.mxu0 %v273
  %850 = vmatprep.mubr.f32.mxu0 %v32
  %851 = vmatmul.mubr.f32.gmra.mxu0 %v31
  %v852 = vpop.f32.mrf.mxu0
  %v853 = vadd.f32 %v783, %v852
  %v854 = vpop.f32.mrf.mxu0
  %855 = vdwg.mxu0
  %v856 = vld [vmem:[%s3] sm:$0xff]
  %v857 = vld [vmem:[%s3 + $0x8] sm:$0xff]
  %v858 = vld [vmem:[%s3 + $0x10] sm:$0xff]
  %vm859 = vcmask 195584
  %v861 = vsel %vm859, %v853, 0
  %863 = vmatprep.subr.mxu0 0.0
  %864 = vmatpush1.msra.mxu0 0.0
  %865 = vmatprep.subr.mxu0 0.0
  %866 = vmatpush1.msra.mxu0 0.0
  %867 = vmatprep.subr.mxu0 0.0
  %868 = vmatpush1.msra.mxu0 0.0
  %869 = vmatprep.subr.mxu0 0.0
  %870 = vmatpush1.msra.mxu0 0.0
  %871 = vmatprep.subr.mxu0 0.0
  %872 = vmatpush1.msra.mxu0 0.0
  %873 = vmatprep.subr.mxu0 0.0
  %874 = vmatpush1.msra.mxu0 0.0
  %875 = vmatprep.subr.mxu0 0.0
  %876 = vmatpush1.msra.mxu0 0.0
  %877 = vmatprep.subr.mxu0 0.0
  %878 = vmatpush1.msra.mxu0 0.0
  %879 = vmatprep.subr.mxu0 0.0
  %880 = vmatpush1.msra.mxu0 0.0
  %881 = vmatprep.subr.mxu0 0.0
  %882 = vmatpush1.msra.mxu0 0.0
  %883 = vmatprep.subr.mxu0 0.0
  %884 = vmatpush1.msra.mxu0 0.0
  %885 = vmatprep.subr.mxu0 0.0
  %886 = vmatpush1.msra.mxu0 0.0
  %887 = vmatprep.subr.mxu0 0.0
  %888 = vmatpush1.msra.mxu0 0.0
  %889 = vmatprep.subr.mxu0 0.0
  %890 = vmatpush1.msra.mxu0 %v858
  %891 = vmatprep.subr.mxu0 0.0
  %892 = vmatpush1.msra.mxu0 %v857
  %893 = vmatprep.subr.mxu0 0.0
  %894 = vmatpush1.msra.mxu0 %v856
  %895 = vmatprep.subr.mxu0 0.0
  %896 = vmatpush2.msra.mxu0 0.0
  %897 = vmatprep.subr.mxu0 0.0
  %898 = vmatpush2.msra.mxu0 0.0
  %899 = vmatprep.subr.mxu0 0.0
  %900 = vmatpush2.msra.mxu0 0.0
  %901 = vmatprep.subr.mxu0 0.0
  %902 = vmatpush2.msra.mxu0 0.0
  %903 = vmatprep.subr.mxu0 0.0
  %904 = vmatpush2.msra.mxu0 0.0
  %905 = vmatprep.subr.mxu0 0.0
  %906 = vmatpush2.msra.mxu0 0.0
  %907 = vmatprep.subr.mxu0 0.0
  %908 = vmatpush2.msra.mxu0 0.0
  %909 = vmatprep.subr.mxu0 0.0
  %910 = vmatpush2.msra.mxu0 0.0
  %911 = vmatprep.subr.mxu0 0.0
  %912 = vmatpush2.msra.mxu0 0.0
  %913 = vmatprep.subr.mxu0 0.0
  %914 = vmatpush2.msra.mxu0 0.0
  %915 = vmatprep.subr.mxu0 0.0
  %916 = vmatpush2.msra.mxu0 0.0
  %917 = vmatprep.subr.mxu0 0.0
  %918 = vmatpush2.msra.mxu0 0.0
  %919 = vmatprep.subr.mxu0 0.0
  %920 = vmatpush2.msra.mxu0 0.0
  %921 = vmatprep.subr.mxu0 0.0
  %922 = vmatpush2.msra.mxu0 0.0
  %923 = vmatprep.subr.mxu0 0.0
  %924 = vmatpush2.msra.mxu0 0.0
  %925 = vmatprep.subr.mxu0 0.0
  %926 = vmatpush2.msra.mxu0 0.0
  %927 = vmatprep.mubr.f32.mxu0 0.0
  %928 = vmatmul.mubr.f32.gmra.mxu0 %v861
  %v929 = vpop.f32.mrf.mxu0
  %v930 = vadd.f32 0.0, %v929
  %v931 = vpop.f32.mrf.mxu0
  %932 = vdwg.mxu0
  %v933 = vlaneseq
  %v934 = vand.u32 %v933, 127
  %vm935 = vcmp.lt.s32.totalorder %v934, 16
  %v936 = vmul.f32 %v853, %v853
  %v937 = vmul.f32 %v930, %v930
  %v938 = vadd.f32 %v936, %v937
  %v939 = vrsqrt.pop %v938
  %v940 = vmul.f32 %v938, %v939
  %vm941 = vcmp.eq.f32.partialorder %v938, inf
  %v942 = vsel %vm941, %v938, %v940
  %vm943 = vcmp.eq.f32.partialorder %v938, 0.0
  %v944 = vand.u32 %v938, 2147483648
  %v945 = vsel %vm943, %v944, %v942
  %v946 = vmax.f32 %v945, 1e-12
  %v947 = vrcp.pop %v946
  %v948 = vmul.f32 %v853, %v947
  %v949 = vmax.f32 %v853, %v930
  %v950 = vsub.f32 %v853, %v949
  %v951 = vmul.f32 %v950, 1.442695
  %v952 = vpow.pop %v951
  %v953 = vsub.f32 %v930, %v949
  %v954 = vmul.f32 %v953, 1.442695
  %v955 = vpow.pop %v954
  %v956 = vadd.f32 %v952, %v955
  %v957 = vrcp.pop %v956
  %v958 = vmul.f32 %v952, %v957
  %v959 = vsel %vm935, %v948, %v958
  %960 = vst.msk [vmem:[%s4] sm:$0xff] %vm859, %v959
  // Predicated region
  $region18: #{model_forward.1} parent=0 // pred_check
    _
  $region19: #{model_forward.1} parent=0 // pred_check_branch
    %962 = sbr.rel (0) target = $region21
  $region20: #{model_forward.1} parent=0 // pred_region
    _
  $region21: #{model_forward.1} parent=0 // pred_fallthru
    _
  // Predicated region
  $region22: #{model_forward.1} parent=0 // pred_check
    _
  $region23: #{model_forward.1} parent=0 // pred_check_branch
    %964 = sbr.rel (0) target = $region25
  $region24: #{model_forward.1} parent=0 // pred_region
    _
  $region25: #{model_forward.1} parent=0 // pred_fallthru
    _

</llo_original>
